<compile_context>
chip_gen: v7x
topology: tpu7x:2x2x1
jax: 0.10.0
libtpu: 0.0.40
codegen_flags: <defaults>
</compile_context>

<pallas_src>
import jax
import jax.numpy as jnp
from jax.experimental import pallas as pl
from jax.experimental.pallas import tpu as pltpu


def _classhead_kernel(x_ref, w_ref, b_ref, o_ref):
    # x_ref: (C, thw)   w_ref: (N, C)   b_ref: (N, 1)   o_ref: (N, thw)
    acc = jnp.dot(w_ref[...], x_ref[...], preferred_element_type=jnp.float32)
    o_ref[...] = (acc + b_ref[...]).astype(o_ref.dtype)


def _pick_tile_hw(HW, B, C, itemsize, tile_hw):
    """Largest lane tile over H*W such that:
       (a) it is a multiple of 128 (or the full extent for tiny maps),
       (b) the two double-buffered x tiles stay <= 8 MiB of VMEM,
       (c) the grid keeps >= 4 blocks for megacore sharding + pipelining."""
    if HW <= 128:
        return HW
    vmem_cap_bytes = 8 * 1024 * 1024            # budget for the 2 x buffers
    max_t = max(128, vmem_cap_bytes // (2 * C * itemsize))
    t = min(tile_hw, HW, max_t)
    t = max(128, (t // 128) * 128)
    while t > 128 and B * pl.cdiv(HW, t) < 4:
        t = max(128, ((t // 2) // 128) * 128)
    return t


def class_head_forward(x_nchw, conv_w, conv_b, *, num_anchors=3, tile_hw=2048,
                       use_bf16=False):
    """JAX/Pallas equivalent of ClassHead.forward.

    x_nchw : (B, C, H, W)
    conv_w : (2*num_anchors, C, 1, 1)   (PyTorch nn.Conv2d weight layout)
    conv_b : (2*num_anchors,)
    returns: (B, H*W*num_anchors, 2) float32
    """
    B, C, H, W = x_nchw.shape
    N = conv_w.shape[0]
    assert N == 2 * num_anchors
    HW = H * W

    # Free reshape on NCHW-contiguous data: NO activation transpose in HBM.
    x_rows = x_nchw.reshape(B, C, HW)
    w_mat = conv_w.reshape(N, C)                 # (N, C)
    b_col = conv_b.reshape(N, 1).astype(jnp.float32)

    if use_bf16:
        # Only pays off if the bf16 activations already originate upstream;
        # a standalone astype is itself a full HBM read+write pass.
        x_rows = x_rows.astype(jnp.bfloat16)
        w_mat = w_mat.astype(jnp.bfloat16)

    itemsize = jnp.dtype(x_rows.dtype).itemsize
    thw = _pick_tile_hw(HW, B, C, itemsize, tile_hw)
    grid = (B, pl.cdiv(HW, thw))                 # ragged edge masked by Pallas

    cost = pl.CostEstimate(
        flops=2 * B * HW * C * N,
        transcendentals=0,
        bytes_accessed=B * C * HW * itemsize + B * N * HW * 4 + N * C * itemsize,
    )

    out = pl.pallas_call(
        _classhead_kernel,
        grid=grid,
        in_specs=[
            pl.BlockSpec((None, C, thw), lambda b, j: (b, 0, j)),  # x: (C, thw)
            pl.BlockSpec((N, C), lambda b, j: (0, 0)),             # weight (resident)
            pl.BlockSpec((N, 1), lambda b, j: (0, 0)),             # bias   (resident)
        ],
        out_specs=pl.BlockSpec((None, N, thw), lambda b, j: (b, 0, j)),
        out_shape=jax.ShapeDtypeStruct((B, N, HW), jnp.float32),
        compiler_params=pltpu.CompilerParams(
            dimension_semantics=("parallel", "parallel")),
        cost_estimate=cost,
    )(x_rows, w_mat, b_col)

    # Only the small (B, N, HW) output is transposed (C/N times fewer bytes
    # than transposing x); then regroup exactly like PyTorch's .view(B,-1,2).
    out_nhwc = jnp.transpose(out, (0, 2, 1))     # (B, HW, N) == permute(0,2,3,1)
    return out_nhwc.reshape(B, HW * num_anchors, 2)


if __name__ == "__main__":
    key = jax.random.PRNGKey(0)
    B, C, H, W = 2, 64, 16, 16          # small demo shapes (C=64 instead of 512)
    num_anchors = 3
    N = 2 * num_anchors

    kx, kw, kb = jax.random.split(key, 3)
    x = jax.random.normal(kx, (B, C, H, W), dtype=jnp.float32)
    conv_w = 0.05 * jax.random.normal(kw, (N, C, 1, 1), dtype=jnp.float32)
    conv_b = 0.05 * jax.random.normal(kb, (N,), dtype=jnp.float32)

    out = class_head_forward(x, conv_w, conv_b, num_anchors=num_anchors)
    out = jax.block_until_ready(out)

    # Pure-JAX reference of the PyTorch forward (1x1 conv + permute + view).
    ref = jnp.einsum('bchw,nc->bhwn', x, conv_w.reshape(N, C),
                     precision=jax.lax.Precision.HIGHEST) + conv_b
    ref = ref.reshape(B, H * W * num_anchors, 2)

    assert out.shape == (B, H * W * num_anchors, 2), out.shape
    max_err = float(jnp.max(jnp.abs(out - ref)))
    assert jnp.allclose(out, ref, atol=1e-2, rtol=1e-2), max_err
    print("KERNEL_OK")
</pallas_src>

<mosaic_0001>
module attributes {stable_mosaic.version = 11 : i64} {
  func.func @_classhead_kernel(%arg0: i32, %arg1: i32, %arg2: memref<1x64x128xf32, #tpu.memory_space<vmem>>, %arg3: memref<6x64xf32, #tpu.memory_space<vmem>>, %arg4: memref<6x1xf32, #tpu.memory_space<vmem>>, %arg5: memref<1x6x128xf32, #tpu.memory_space<vmem>>) attributes {dimension_semantics = [#tpu.dimension_semantics<parallel>, #tpu.dimension_semantics<parallel>], iteration_bounds = array<i64: 2, 2>, scalar_prefetch = 0 : i64, scratch_operands = 0 : i64, tpu.core_type = #tpu.core_type<tc>, window_params = [{transform_indices = @transform_0, window_bounds = array<i64: 1, 64, 128>}, {pipeline_mode = #tpu.pipeline_mode<synchronous>, transform_indices = @transform_1, window_bounds = array<i64: 6, 64>}, {pipeline_mode = #tpu.pipeline_mode<synchronous>, transform_indices = @transform_2, window_bounds = array<i64: 6, 1>}, {transform_indices = @transform_3, window_bounds = array<i64: 1, 6, 128>}]} {
    %c0 = arith.constant 0 : index
    %c0_0 = arith.constant 0 : index
    %0 = vector.load %arg3[%c0, %c0_0] : memref<6x64xf32, #tpu.memory_space<vmem>>, vector<6x64xf32>
    %c0_1 = arith.constant 0 : index
    %c0_2 = arith.constant 0 : index
    %c0_3 = arith.constant 0 : index
    %1 = vector.load %arg2[%c0_1, %c0_2, %c0_3] : memref<1x64x128xf32, #tpu.memory_space<vmem>>, vector<1x64x128xf32>
    %2 = vector.shape_cast %1 : vector<1x64x128xf32> to vector<64x128xf32>
    %cst = arith.constant dense<0.000000e+00> : vector<6x128xf32>
    %3 = tpu.matmul %0, %2, %cst {dimension_numbers = #tpu.dot_dimension_numbers<[1], [0], [0], [1], [0, 0, 1, 1], [], []>} : vector<6x64xf32>, vector<64x128xf32>, vector<6x128xf32> -> vector<6x128xf32>
    %c0_4 = arith.constant 0 : index
    %c0_5 = arith.constant 0 : index
    %4 = vector.load %arg4[%c0_4, %c0_5] : memref<6x1xf32, #tpu.memory_space<vmem>>, vector<6x1xf32>
    %5 = vector.broadcast %4 : vector<6x1xf32> to vector<6x128xf32>
    %6 = arith.addf %3, %5 : vector<6x128xf32>
    %c0_6 = arith.constant 0 : index
    %c0_7 = arith.constant 0 : index
    %c0_8 = arith.constant 0 : index
    %7 = vector.load %arg5[%c0_6, %c0_7, %c0_8] : memref<1x6x128xf32, #tpu.memory_space<vmem>>, vector<1x6x128xf32>
    %8 = vector.shape_cast %7 : vector<1x6x128xf32> to vector<6x128xf32>
    %9 = vector.shape_cast %6 : vector<6x128xf32> to vector<1x6x128xf32>
    tpu.vector_store %arg5[%c0_6, %c0_7, %c0_8], %9 {strides = array<i32>} : memref<1x6x128xf32, #tpu.memory_space<vmem>>, vector<1x6x128xf32>,
    return
  }
  func.func @transform_0(%arg0: i32, %arg1: i32) -> (i32, i32, i32) {
    %c0_i32 = arith.constant 0 : i32
    %c0_i32_0 = arith.constant 0 : i32
    return %arg0, %c0_i32, %arg1 : i32, i32, i32
  }
  func.func @transform_1(%arg0: i32, %arg1: i32) -> (i32, i32) {
    %c0_i32 = arith.constant 0 : i32
    %c0_i32_0 = arith.constant 0 : i32
    %c0_i32_1 = arith.constant 0 : i32
    return %c0_i32, %c0_i32_0 : i32, i32
  }
  func.func @transform_2(%arg0: i32, %arg1: i32) -> (i32, i32) {
    %c0_i32 = arith.constant 0 : i32
    %c0_i32_0 = arith.constant 0 : i32
    %c0_i32_1 = arith.constant 0 : i32
    return %c0_i32, %c0_i32_0 : i32, i32
  }
  func.func @transform_3(%arg0: i32, %arg1: i32) -> (i32, i32, i32) {
    %c0_i32 = arith.constant 0 : i32
    %c0_i32_0 = arith.constant 0 : i32
    return %arg0, %c0_i32, %arg1 : i32, i32, i32
  }
}

</mosaic_0001>

<llo_original>
// kernel: tpu_custom_call.1
$region0: #{tpu_custom_call.1}
  #allocation0 [shape = 'u32[]', space=smem, size = 0x4, offset = 0x4, fixed_abs, tag = 'smem constant byte address 0x4 - core index']
  #allocation1 [shape = 'u32[144,128]{1,0:T(1,128)}', space=vmem, size = 0x12000, scoped, tag = 'internal scratch']
  %s0 = inlined_call_operand.hbm [shape: f32[2,64,256], index: 0, kind: input, shape index: {}]
  %s1 = inlined_call_operand.vmem [shape: f32[6,64], index: 1, kind: input, shape index: {}]
  %s2 = inlined_call_operand.vmem [shape: f32[6,1], index: 2, kind: input, shape index: {}]
  %s3 = inlined_call_operand.vmem [shape: f32[2,6,256], index: 3, kind: output, shape index: {}]
  %s4 = sld [smem:[#allocation0]]
  $region49: #{tpu_custom_call.1} parent=0
    _
  %s6 = ssub.s32 1, %s4
  %s7 = scalar_select 0, %s6, %s4
  $region1: #{tpu_custom_call.1} parent=0
    #allocation2 [shape = 'u8[65536]{0}', space=vmem, size = 0x10000, scoped, tag = 'input window, operand 0']
    #allocation3 [shape = 's32[2]{0}', space=sflag, size = 0x8, scoped, tag = 'scoped memory for tpu_custom_call.1']
    %8 = vsyncpa [#allocation3], 0
    %s9 = scalar_lea.sflag [#allocation3], 1
    %10 = vsyncpa %s9, 0
    loop: start=0, step=1, limit=6
    $region2: #{tpu_custom_call.1} parent=1 // loop_pre_header
      _
    $region3: #{tpu_custom_call.1} parent=1 // loop_header
      %s12 = sphi 0, %s16
      %p13 = scmp.ge.s32.totalorder %s12, 6
      %s19 = sphi 0, %s31
      %s20 = sphi 0, %s27
      %s21 = sphi 0, %s19
      %s22 = sphi 0, %s20
      %s23 = sphi 0, %s21
      %s24 = sphi 0, %s22
      %s36 = sphi 0, %s38
      %s39 = sphi 0, %s36
      %s40 = sphi 0, %s39
      %s56 = sphi 0, %s40
      %s60 = sphi 0, %s60
      %s62 = sphi 0, %s60
      %s63 = sphi 0, %s62
      %s77 = sphi 0, %s63
      %s81 = sphi 0, %s81
      %s83 = sphi 0, %s81
      %s84 = sphi 0, %s83
      %s98 = sphi 0, %s84
      %s106 = sphi 0, %s108
      %s109 = sphi 0, %s106
      %s110 = sphi 0, %s109
      %s126 = sphi 0, %s110
    $region4: #{tpu_custom_call.1} parent=1 // loop_header_branch
      %15 = sbr.rel (%p13) target = $region8
    $region5: #{tpu_custom_call.1} parent=1 // loop_body
      %s17 = ssub.s32 %s12, 1
      %s18 = ssub.s32 %s12, 2
      %s25 = sadd.s32 1, %s20
      %p26 = scmp.ge.s32.totalorder %s25, 2
      %s27 = scalar_select %p26, 0, %s25
      %s28 = sadd.s32 1, %s19
      %s29 = scalar_select %p26, %s28, %s19
      %p30 = scmp.ge.s32.totalorder %s29, 2
      %s31 = scalar_select %p30, 0, %s29
      %s32 = ssub.s32 %s19, %s31
      %s33 = ssub.s32 %s20, %s27
      %s34 = sor.u32 %s32, %s33
      %p35 = scmp.eq.s32.totalorder %s34, 0
      %s37 = sadd.s32 %s36, 1
      %s38 = scalar_select %p35, %s36, %s37
      %p41 = pneg %p35
      %p42 = scmp.eq.s32.totalorder %s12, 3
      %p43 = por %p41, %p42
      %p44 = scmp.ne.s32.totalorder %s36, %s39
      %p45 = scmp.eq.s32.totalorder %s12, 0
      %p46 = por %p44, %p45
      %p47 = scmp.ne.s32.totalorder %s36, %s39
      %p48 = scmp.eq.s32.totalorder %s17, 3
      %p49 = por %p47, %p48
      %p50 = scmp.ne.s32.totalorder %s39, %s40
      %p51 = scmp.eq.s32.totalorder %s17, 0
      %p52 = por %p50, %p51
      %p53 = scmp.ne.s32.totalorder %s39, %s40
      %p54 = scmp.eq.s32.totalorder %s18, 3
      %p55 = por %p53, %p54
      %p57 = scmp.ne.s32.totalorder %s40, %s56
      %p58 = scmp.eq.s32.totalorder %s18, 0
      %p59 = por %p57, %p58
      %s61 = sadd.s32 %s60, 1
      %p64 = scmp.eq.s32.totalorder %s12, 3
      %p65 = scmp.ne.s32.totalorder %s60, %s62
      %p66 = scmp.eq.s32.totalorder %s12, 0
      %p67 = por %p65, %p66
      %p68 = scmp.ne.s32.totalorder %s60, %s62
      %p69 = scmp.eq.s32.totalorder %s17, 3
      %p70 = por %p68, %p69
      %p71 = scmp.ne.s32.totalorder %s62, %s63
      %p72 = scmp.eq.s32.totalorder %s17, 0
      %p73 = por %p71, %p72
      %p74 = scmp.ne.s32.totalorder %s62, %s63
      %p75 = scmp.eq.s32.totalorder %s18, 3
      %p76 = por %p74, %p75
      %p78 = scmp.ne.s32.totalorder %s63, %s77
      %p79 = scmp.eq.s32.totalorder %s18, 0
      %p80 = por %p78, %p79
      %s82 = sadd.s32 %s81, 1
      %p85 = scmp.eq.s32.totalorder %s12, 3
      %p86 = scmp.ne.s32.totalorder %s81, %s83
      %p87 = scmp.eq.s32.totalorder %s12, 0
      %p88 = por %p86, %p87
      %p89 = scmp.ne.s32.totalorder %s81, %s83
      %p90 = scmp.eq.s32.totalorder %s17, 3
      %p91 = por %p89, %p90
      %p92 = scmp.ne.s32.totalorder %s83, %s84
      %p93 = scmp.eq.s32.totalorder %s17, 0
      %p94 = por %p92, %p93
      %p95 = scmp.ne.s32.totalorder %s83, %s84
      %p96 = scmp.eq.s32.totalorder %s18, 3
      %p97 = por %p95, %p96
      %p99 = scmp.ne.s32.totalorder %s84, %s98
      %p100 = scmp.eq.s32.totalorder %s18, 0
      %p101 = por %p99, %p100
      %s102 = ssub.s32 %s19, %s31
      %s103 = ssub.s32 %s20, %s27
      %s104 = sor.u32 %s102, %s103
      %p105 = scmp.eq.s32.totalorder %s104, 0
      %s107 = sadd.s32 %s106, 1
      %s108 = scalar_select %p105, %s106, %s107
      %p111 = pneg %p105
      %p112 = scmp.eq.s32.totalorder %s12, 3
      %p113 = por %p111, %p112
      %p114 = scmp.ne.s32.totalorder %s106, %s109
      %p115 = scmp.eq.s32.totalorder %s12, 0
      %p116 = por %p114, %p115
      %p117 = scmp.ne.s32.totalorder %s106, %s109
      %p118 = scmp.eq.s32.totalorder %s17, 3
      %p119 = por %p117, %p118
      %p120 = scmp.ne.s32.totalorder %s109, %s110
      %p121 = scmp.eq.s32.totalorder %s17, 0
      %p122 = por %p120, %p121
      %p123 = scmp.ne.s32.totalorder %s109, %s110
      %p124 = scmp.eq.s32.totalorder %s18, 3
      %p125 = por %p123, %p124
      %p127 = scmp.ne.s32.totalorder %s110, %s126
      %p128 = scmp.eq.s32.totalorder %s18, 0
      %p129 = por %p127, %p128
      %p130 = scmp.le.s32.totalorder 1, %s12
      %p131 = scmp.lt.s32.totalorder %s12, 5
      %p132 = pnand %p130, %p131
      %p133 = pneg %p132
      // Predicated region
      $region9: #{tpu_custom_call.1} parent=5 // pred_check
        _
      $region10: #{tpu_custom_call.1} parent=5 // pred_check_branch
        %135 = sbr.rel (%p132) target = $region12
      $region11: #{tpu_custom_call.1} parent=5 // pred_region
        %s136 = ssub.s32 %s12, 1
        // Predicated region
        $region13: #{tpu_custom_call.1} parent=11 // pred_check
          %p137 = pneg %p73
        $region14: #{tpu_custom_call.1} parent=11 // pred_check_branch
          %139 = sbr.rel (%p137) target = $region16
        $region15: #{tpu_custom_call.1} parent=11 // pred_region
          _
        $region16: #{tpu_custom_call.1} parent=11 // pred_fallthru
          _
        // Predicated region
        $region17: #{tpu_custom_call.1} parent=11 // pred_check
          %p140 = pneg %p94
        $region18: #{tpu_custom_call.1} parent=11 // pred_check_branch
          %142 = sbr.rel (%p140) target = $region20
        $region19: #{tpu_custom_call.1} parent=11 // pred_region
          _
        $region20: #{tpu_custom_call.1} parent=11 // pred_fallthru
          _
      $region12: #{tpu_custom_call.1} parent=5 // pred_fallthru
        _
      %p143 = scmp.lt.s32.totalorder %s12, 4
      // Predicated region
      $region21: #{tpu_custom_call.1} parent=5 // pred_check
        %p144 = pneg %p143
      $region22: #{tpu_custom_call.1} parent=5 // pred_check_branch
        %146 = sbr.rel (%p144) target = $region24
      $region23: #{tpu_custom_call.1} parent=5 // pred_region
        // Predicated region
        $region25: #{tpu_custom_call.1} parent=23 // pred_check
          %p147 = pneg %p46
        $region26: #{tpu_custom_call.1} parent=23 // pred_check_branch
          %149 = sbr.rel (%p147) target = $region28
        $region27: #{tpu_custom_call.1} parent=23 // pred_region
          %s150 = sand.u32 %s36, 1
          %s151 = scalar_lea.sflag [#allocation3], %s150
          %s152 = sand.u32 %s36, 1
          %s153 = smul.addr %s152, 64
          %s154 = scalar_lea.vmem [#allocation2], %s153
          %s156 = ssub.s32 1024, 1024
          %157 = vsyncadd %s151, %s156
          %s158 = smul.addr %s19, 16
          %s159 = sadd.s32 %s20, %s158
          %s160 = smul.addr %s159, 128
          %s161 = scalar_lea.hbm %s0, %s160
          %s162 = sshll.u32 %s154, 4
          %s163 = int_to_ptr.vmem [resolvable:$true] %s162
          %168 = dma.hbm_to_vmem [thread:$0]  %s161, 1024, %s163, %s151, 256, 128, 8
        $region28: #{tpu_custom_call.1} parent=23 // pred_fallthru
          _
      $region24: #{tpu_custom_call.1} parent=5 // pred_fallthru
        _
      %p169 = scmp.le.s32.totalorder 1, %s12
      %p170 = scmp.lt.s32.totalorder %s12, 5
      %p171 = pnand %p169, %p170
      %p172 = pneg %p171
      // Predicated region
      $region29: #{tpu_custom_call.1} parent=5 // pred_check
        _
      $region30: #{tpu_custom_call.1} parent=5 // pred_check_branch
        %174 = sbr.rel (%p171) target = $region32
      $region31: #{tpu_custom_call.1} parent=5 // pred_region
        %s175 = ssub.s32 %s12, 1
        %s176 = sand.u32 %s39, 1
        %s177 = scalar_lea.sflag [#allocation3], %s176
        %s178 = sand.u32 %s39, 1
        %s179 = smul.addr %s178, 64
        %s180 = scalar_lea.vmem [#allocation2], %s179
        // Predicated region
        $region33: #{tpu_custom_call.1} parent=31 // pred_check
          %p181 = pneg %p52
        $region34: #{tpu_custom_call.1} parent=31 // pred_check_branch
          %183 = sbr.rel (%p181) target = $region36
        $region35: #{tpu_custom_call.1} parent=31 // pred_region
          %184 = dma.done %s177, 1024
        $region36: #{tpu_custom_call.1} parent=31 // pred_fallthru
          _
        %s185 = sand.u32 %s39, 1
        %s186 = scalar_lea.sflag [#allocation3], %s185
        %s187 = sand.u32 %s39, 1
        %s188 = smul.addr %s187, 64
        %s189 = scalar_lea.vmem [#allocation2], %s188
        %p190 = pneg %p52
        %p191 = pneg %p49
        %p192 = pneg %p73
        %p193 = pneg %p70
        %p194 = pneg %p94
        %p195 = pneg %p91
        %p196 = pneg %p122
        %p197 = pneg %p119
        %p198 = scmp.lt.s32.totalorder %s21, 1
        %s199 = scalar_select %p198, %s21, 1
        %p200 = scmp.lt.s32.totalorder %s22, 1
        %s201 = scalar_select %p200, %s22, 1
        %s202 = smul.addr %s199, 2
        %s203 = sadd.s32 %s201, %s202
        %s204 = smul.addr %s203, 8
        %s205 = scalar_lea.vmem %s3, %s204
        %p206 = scmp.lt.s32.totalorder %s21, 1
        %s207 = scalar_select %p206, %s21, 1
        %p208 = scmp.lt.s32.totalorder %s22, 1
        %s209 = scalar_select %p208, %s22, 1
        %s210 = smul.addr %s207, 2
        %s211 = sadd.s32 %s209, %s210
        %s212 = smul.addr %s211, 8
        %s213 = scalar_lea.vmem %s3, %s212
        %v214 = vld [vmem:[%s1] sm:$0x3f]
        %v215 = vld [vmem:[%s180] sm:$0xff]
        %v216 = vld [vmem:[%s180 + $0x8] sm:$0xff]
        %v217 = vld [vmem:[%s180 + $0x10] sm:$0xff]
        %v218 = vld [vmem:[%s180 + $0x18] sm:$0xff]
        %v219 = vld [vmem:[%s180 + $0x20] sm:$0xff]
        %v220 = vld [vmem:[%s180 + $0x28] sm:$0xff]
        %v221 = vld [vmem:[%s180 + $0x30] sm:$0xff]
        %v222 = vld [vmem:[%s180 + $0x38] sm:$0xff]
        %v223 = vld [vmem:[%s2] sm:$0x3f]
        %225 = vset.pattern.permute.xlu0 0
        %226 = vperm.xlu0 %225, %v223
        %v227 = vpop.permute.xlu0 %226
        %vm229 = vcmask 523264
        %v231 = vsel %vm229, %v214, 0
        %233 = vmatprep.subr.mxu0 0.0
        %234 = vmatpush1.msra.mxu0 %v215
        %235 = vmatprep.subr.mxu0 0.0
        %236 = vmatpush1.msra.mxu0 %v216
        %237 = vmatprep.subr.mxu0 0.0
        %238 = vmatpush1.msra.mxu0 %v217
        %239 = vmatprep.subr.mxu0 0.0
        %240 = vmatpush1.msra.mxu0 %v218
        %241 = vmatprep.subr.mxu0 0.0
        %242 = vmatpush1.msra.mxu0 %v219
        %243 = vmatprep.subr.mxu0 0.0
        %244 = vmatpush1.msra.mxu0 %v220
        %245 = vmatprep.subr.mxu0 0.0
        %246 = vmatpush1.msra.mxu0 %v221
        %247 = vmatprep.subr.mxu0 0.0
        %248 = vmatpush1.msra.mxu0 %v222
        %249 = vmatprep.subr.mxu0 0.0
        %250 = vmatpush1.msra.mxu0 0.0
        %251 = vmatprep.subr.mxu0 0.0
        %252 = vmatpush1.msra.mxu0 0.0
        %253 = vmatprep.subr.mxu0 0.0
        %254 = vmatpush1.msra.mxu0 0.0
        %255 = vmatprep.subr.mxu0 0.0
        %256 = vmatpush1.msra.mxu0 0.0
        %257 = vmatprep.subr.mxu0 0.0
        %258 = vmatpush1.msra.mxu0 0.0
        %259 = vmatprep.subr.mxu0 0.0
        %260 = vmatpush1.msra.mxu0 0.0
        %261 = vmatprep.subr.mxu0 0.0
        %262 = vmatpush1.msra.mxu0 0.0
        %263 = vmatprep.subr.mxu0 0.0
        %264 = vmatpush1.msra.mxu0 0.0
        %265 = vmatprep.subr.mxu0 0.0
        %266 = vmatpush1.msra.mxu0 0.0
        %267 = vmatprep.subr.mxu0 0.0
        %268 = vmatpush1.msra.mxu0 0.0
        %269 = vmatprep.subr.mxu0 0.0
        %270 = vmatpush1.msra.mxu0 0.0
        %271 = vmatprep.subr.mxu0 0.0
        %272 = vmatpush1.msra.mxu0 0.0
        %273 = vmatprep.subr.mxu0 0.0
        %274 = vmatpush1.msra.mxu0 0.0
        %275 = vmatprep.subr.mxu0 0.0
        %276 = vmatpush1.msra.mxu0 0.0
        %277 = vmatprep.subr.mxu0 0.0
        %278 = vmatpush1.msra.mxu0 0.0
        %279 = vmatprep.subr.mxu0 0.0
        %280 = vmatpush1.msra.mxu0 0.0
        %281 = vmatprep.subr.mxu0 0.0
        %282 = vmatpush1.msra.mxu0 0.0
        %283 = vmatprep.subr.mxu0 0.0
        %284 = vmatpush1.msra.mxu0 0.0
        %285 = vmatprep.subr.mxu0 0.0
        %286 = vmatpush1.msra.mxu0 0.0
        %287 = vmatprep.subr.mxu0 0.0
        %288 = vmatpush1.msra.mxu0 0.0
        %289 = vmatprep.subr.mxu0 0.0
        %290 = vmatpush1.msra.mxu0 0.0
        %291 = vmatprep.subr.mxu0 0.0
        %292 = vmatpush1.msra.mxu0 0.0
        %293 = vmatprep.subr.mxu0 0.0
        %294 = vmatpush1.msra.mxu0 0.0
        %295 = vmatprep.subr.mxu0 0.0
        %296 = vmatpush1.msra.mxu0 0.0
        %297 = vmatprep.mubr.f32.mxu0 0.0
        %298 = vmatmul.mubr.f32.gmra.mrb[0].mxu0 %v231
        %v299 = vpop.f32.mrb[0].mxu0
        %v300 = vadd.f32 %v227, %v299
        %v301 = vpop.f32.mrb[0].mxu0
        %302 = vdwg.mxu0
        %303 = vst [vmem:[%s213] sm:$0x3f] %v300
        %p304 = scmp.lt.s32.totalorder %s21, 1
        %s305 = scalar_select %p304, %s21, 1
        %p306 = scmp.lt.s32.totalorder %s22, 1
        %s307 = scalar_select %p306, %s22, 1
        %s308 = smul.addr %s305, 2
        %s309 = sadd.s32 %s307, %s308
        %s310 = smul.addr %s309, 8
        %s311 = scalar_lea.vmem %s3, %s310
        // Predicated region
        $region37: #{tpu_custom_call.1} parent=31 // pred_check
          %p312 = pneg %p119
        $region38: #{tpu_custom_call.1} parent=31 // pred_check_branch
          %314 = sbr.rel (%p312) target = $region40
        $region39: #{tpu_custom_call.1} parent=31 // pred_region
          _
        $region40: #{tpu_custom_call.1} parent=31 // pred_fallthru
          _
      $region32: #{tpu_custom_call.1} parent=5 // pred_fallthru
        _
      %p315 = scmp.le.s32.totalorder 2, %s12
      // Predicated region
      $region41: #{tpu_custom_call.1} parent=5 // pred_check
        %p316 = pneg %p315
      $region42: #{tpu_custom_call.1} parent=5 // pred_check_branch
        %318 = sbr.rel (%p316) target = $region44
      $region43: #{tpu_custom_call.1} parent=5 // pred_region
        %s319 = ssub.s32 %s12, 2
        // Predicated region
        $region45: #{tpu_custom_call.1} parent=43 // pred_check
          %p320 = pneg %p125
        $region46: #{tpu_custom_call.1} parent=43 // pred_check_branch
          %322 = sbr.rel (%p320) target = $region48
        $region47: #{tpu_custom_call.1} parent=43 // pred_region
          %p323 = scmp.lt.s32.totalorder %s23, 1
          %s324 = scalar_select %p323, %s23, 1
          %p325 = scmp.lt.s32.totalorder %s24, 1
          %s326 = scalar_select %p325, %s24, 1
          %s327 = smul.addr %s324, 2
          %s328 = sadd.s32 %s326, %s327
          %s329 = smul.addr %s328, 8
          %s330 = scalar_lea.vmem %s3, %s329
        $region48: #{tpu_custom_call.1} parent=43 // pred_fallthru
          _
      $region44: #{tpu_custom_call.1} parent=5 // pred_fallthru
        _
    $region6: #{tpu_custom_call.1} parent=1 // loop_footer
      %s16 = sadd.s32 1, %s12
    $region7: #{tpu_custom_call.1} parent=1 // loop_footer_branch
      %11 = sbr.rel target = $region3
    $region8: #{tpu_custom_call.1} parent=1 // loop_exit
      _
    %331 = vsyncpa [#allocation3], 1
    %s332 = scalar_lea.sflag [#allocation3], 1
    %333 = vsyncpa %s332, 1

</llo_original>
